<compile_context>
chip_gen: v7x
topology: tpu7x:2x2x1
jax: 0.10.0
libtpu: 0.0.40
codegen_flags: <defaults>
</compile_context>

<pallas_src>
import jax
import jax.numpy as jnp
from jax.experimental import pallas as pl
from jax.experimental.pallas import tpu as pltpu


def _vanilla_d_kernel(x_ref, w1_ref, b1_ref, w2_ref, b2_ref, w3_ref, b3_ref,
                      o_ref):
    """Fused 3-layer MLP: (Linear+LeakyReLU) x2 -> Linear -> Sigmoid."""
    x = x_ref[...].astype(jnp.float32)                       # (TB, 784)

    # Layer 1: Linear(784 -> 256) + LeakyReLU(0.2)
    h = jnp.dot(x, w1_ref[...], preferred_element_type=jnp.float32)
    h = h + b1_ref[...]
    h = jnp.maximum(h, 0.2 * h)

    # Layer 2: Linear(256 -> 256) + LeakyReLU(0.2)
    h = jnp.dot(h, w2_ref[...], preferred_element_type=jnp.float32)
    h = h + b2_ref[...]
    h = jnp.maximum(h, 0.2 * h)

    # Layer 3: Linear(256 -> 1) + Sigmoid
    z = jnp.dot(h, w3_ref[...], preferred_element_type=jnp.float32)
    z = z + b3_ref[...]
    o_ref[...] = jax.nn.sigmoid(z).astype(o_ref.dtype)


def vanilla_d_forward(x, w1, b1, w2, b2, w3, b3, *, block_b=256):
    """Equivalent of vanilla_D.forward(x).

    x:  (B, ...) image batch, flattened to (B, img_size*img_size).
    w1: (784, 256)  b1: (256,)      (Linear stored as (in, out); y = x @ W + b)
    w2: (256, 256)  b2: (256,)
    w3: (256, 1)    b3: (1,)
    Returns (B, 1) probabilities.
    """
    B = x.shape[0]
    xf = x.reshape(B, -1)                       # free reshape, no copy
    d_in = xf.shape[1]
    h1 = w1.shape[1]
    h2 = w2.shape[1]

    # Biases as 2-D (1, N) slabs for clean VMEM layout / broadcasting.
    b1_2d = b1.reshape(1, h1)
    b2_2d = b2.reshape(1, h2)
    b3_2d = b3.reshape(1, w3.shape[1])

    # Batch tiling: use the full batch as one block when small (block equal to
    # the full dim is always legal); otherwise tile with a multiple-of-8 block.
    if B <= block_b:
        tb = B
    else:
        tb = block_b  # multiple of 8; last partial block is masked by Pallas
    grid = (pl.cdiv(B, tb),)

    const = lambda i: (0, 0)   # weights/biases resident in VMEM across steps

    return pl.pallas_call(
        _vanilla_d_kernel,
        out_shape=jax.ShapeDtypeStruct((B, 1), jnp.float32),
        grid_spec=pltpu.PrefetchScalarGridSpec(
            num_scalar_prefetch=0,
            grid=grid,
            in_specs=[
                pl.BlockSpec((tb, d_in), lambda i: (i, 0)),   # x tile
                pl.BlockSpec((d_in, h1), const),              # w1
                pl.BlockSpec((1, h1), const),                 # b1
                pl.BlockSpec((h1, h2), const),                # w2
                pl.BlockSpec((1, h2), const),                 # b2
                pl.BlockSpec((h2, 1), const),                 # w3
                pl.BlockSpec((1, 1), const),                  # b3
            ],
            out_specs=pl.BlockSpec((tb, 1), lambda i: (i, 0)),
        ),
        compiler_params=pltpu.CompilerParams(
            dimension_semantics=("parallel",)),
    )(xf, w1, b1_2d, w2, b2_2d, w3, b3_2d)


if __name__ == "__main__":
    key = jax.random.PRNGKey(0)
    img_size = 28          # from the module spec
    batch = 4              # small test batch
    d_in, hidden = img_size * img_size, 256

    ks = jax.random.split(key, 7)
    x = jax.random.normal(ks[0], (batch, 1, img_size, img_size), jnp.float32)
    # Parameters stored as (in_features, out_features): y = x @ W + b,
    # matching nn.Linear's math (PyTorch stores W transposed; values here are
    # just deterministic test weights).
    w1 = jax.random.normal(ks[1], (d_in, hidden), jnp.float32) * 0.03
    b1 = jax.random.normal(ks[2], (hidden,), jnp.float32) * 0.03
    w2 = jax.random.normal(ks[3], (hidden, hidden), jnp.float32) * 0.06
    b2 = jax.random.normal(ks[4], (hidden,), jnp.float32) * 0.06
    w3 = jax.random.normal(ks[5], (hidden, 1), jnp.float32) * 0.06
    b3 = jax.random.normal(ks[6], (1,), jnp.float32) * 0.06

    out = jax.jit(vanilla_d_forward)(x, w1, b1, w2, b2, w3, b3)
    jax.block_until_ready(out)

    # Plain-JAX reference of vanilla_D.forward.
    xf = x.reshape(batch, -1)
    lrelu = lambda v: jnp.maximum(v, 0.2 * v)
    ref = jax.nn.sigmoid(lrelu(lrelu(xf @ w1 + b1) @ w2 + b2) @ w3 + b3)

    assert out.shape == (batch, 1), out.shape
    assert jnp.allclose(out, ref, rtol=1e-5, atol=1e-5), (out, ref)
    print("KERNEL_OK")
</pallas_src>

<mosaic_0001>
module attributes {stable_mosaic.version = 11 : i64} {
  func.func @_vanilla_d_kernel(%arg0: i32, %arg1: memref<4x784xf32, #tpu.memory_space<vmem>>, %arg2: memref<784x256xf32, #tpu.memory_space<vmem>>, %arg3: memref<1x256xf32, #tpu.memory_space<vmem>>, %arg4: memref<256x256xf32, #tpu.memory_space<vmem>>, %arg5: memref<1x256xf32, #tpu.memory_space<vmem>>, %arg6: memref<256x1xf32, #tpu.memory_space<vmem>>, %arg7: memref<1x1xf32, #tpu.memory_space<vmem>>, %arg8: memref<4x1xf32, #tpu.memory_space<vmem>>) attributes {dimension_semantics = [#tpu.dimension_semantics<parallel>], iteration_bounds = array<i64: 1>, scalar_prefetch = 0 : i64, scratch_operands = 0 : i64, tpu.core_type = #tpu.core_type<tc>, window_params = [{transform_indices = @transform_0, window_bounds = array<i64: 4, 784>}, {pipeline_mode = #tpu.pipeline_mode<synchronous>, transform_indices = @transform_1, window_bounds = array<i64: 784, 256>}, {pipeline_mode = #tpu.pipeline_mode<synchronous>, transform_indices = @transform_2, window_bounds = array<i64: 1, 256>}, {pipeline_mode = #tpu.pipeline_mode<synchronous>, transform_indices = @transform_3, window_bounds = array<i64: 256, 256>}, {pipeline_mode = #tpu.pipeline_mode<synchronous>, transform_indices = @transform_4, window_bounds = array<i64: 1, 256>}, {pipeline_mode = #tpu.pipeline_mode<synchronous>, transform_indices = @transform_5, window_bounds = array<i64: 256, 1>}, {pipeline_mode = #tpu.pipeline_mode<synchronous>, transform_indices = @transform_6, window_bounds = array<i64: 1, 1>}, {transform_indices = @transform_7, window_bounds = array<i64: 4, 1>}]} {
    %c0 = arith.constant 0 : index
    %c0_0 = arith.constant 0 : index
    %0 = vector.load %arg1[%c0, %c0_0] : memref<4x784xf32, #tpu.memory_space<vmem>>, vector<4x784xf32>
    %c0_1 = arith.constant 0 : index
    %c0_2 = arith.constant 0 : index
    %1 = vector.load %arg2[%c0_1, %c0_2] : memref<784x256xf32, #tpu.memory_space<vmem>>, vector<784x256xf32>
    %cst = arith.constant dense<0.000000e+00> : vector<4x256xf32>
    %2 = tpu.matmul %0, %1, %cst {dimension_numbers = #tpu.dot_dimension_numbers<[1], [0], [0], [1], [0, 0, 1, 1], [], []>} : vector<4x784xf32>, vector<784x256xf32>, vector<4x256xf32> -> vector<4x256xf32>
    %c0_3 = arith.constant 0 : index
    %c0_4 = arith.constant 0 : index
    %3 = vector.load %arg3[%c0_3, %c0_4] : memref<1x256xf32, #tpu.memory_space<vmem>>, vector<1x256xf32>
    %4 = vector.broadcast %3 : vector<1x256xf32> to vector<4x256xf32>
    %5 = arith.addf %2, %4 : vector<4x256xf32>
    %cst_5 = arith.constant 2.000000e-01 : f32
    %6 = vector.broadcast %cst_5 : f32 to vector<4x256xf32>
    %7 = arith.mulf %6, %5 : vector<4x256xf32>
    %8 = arith.maximumf %5, %7 : vector<4x256xf32>
    %c0_6 = arith.constant 0 : index
    %c0_7 = arith.constant 0 : index
    %9 = vector.load %arg4[%c0_6, %c0_7] : memref<256x256xf32, #tpu.memory_space<vmem>>, vector<256x256xf32>
    %cst_8 = arith.constant dense<0.000000e+00> : vector<4x256xf32>
    %10 = tpu.matmul %8, %9, %cst_8 {dimension_numbers = #tpu.dot_dimension_numbers<[1], [0], [0], [1], [0, 0, 1, 1], [], []>} : vector<4x256xf32>, vector<256x256xf32>, vector<4x256xf32> -> vector<4x256xf32>
    %c0_9 = arith.constant 0 : index
    %c0_10 = arith.constant 0 : index
    %11 = vector.load %arg5[%c0_9, %c0_10] : memref<1x256xf32, #tpu.memory_space<vmem>>, vector<1x256xf32>
    %12 = vector.broadcast %11 : vector<1x256xf32> to vector<4x256xf32>
    %13 = arith.addf %10, %12 : vector<4x256xf32>
    %cst_11 = arith.constant 2.000000e-01 : f32
    %14 = vector.broadcast %cst_11 : f32 to vector<4x256xf32>
    %15 = arith.mulf %14, %13 : vector<4x256xf32>
    %16 = arith.maximumf %13, %15 : vector<4x256xf32>
    %c0_12 = arith.constant 0 : index
    %c0_13 = arith.constant 0 : index
    %17 = vector.load %arg6[%c0_12, %c0_13] : memref<256x1xf32, #tpu.memory_space<vmem>>, vector<256x1xf32>
    %cst_14 = arith.constant dense<0.000000e+00> : vector<4x1xf32>
    %18 = tpu.matmul %16, %17, %cst_14 {dimension_numbers = #tpu.dot_dimension_numbers<[1], [0], [0], [1], [0, 0, 1, 1], [], []>} : vector<4x256xf32>, vector<256x1xf32>, vector<4x1xf32> -> vector<4x1xf32>
    %c0_15 = arith.constant 0 : index
    %c0_16 = arith.constant 0 : index
    %19 = vector.load %arg7[%c0_15, %c0_16] : memref<1x1xf32, #tpu.memory_space<vmem>>, vector<1x1xf32>
    %20 = vector.broadcast %19 : vector<1x1xf32> to vector<4x1xf32>
    %21 = arith.addf %18, %20 : vector<4x1xf32>
    %22 = arith.negf %21 : vector<4x1xf32>
    %23 = math.exp %22 : vector<4x1xf32>
    %cst_17 = arith.constant 1.000000e+00 : f32
    %24 = vector.broadcast %cst_17 : f32 to vector<4x1xf32>
    %25 = arith.addf %24, %23 : vector<4x1xf32>
    %26 = arith.divf %24, %25 : vector<4x1xf32>
    %c0_18 = arith.constant 0 : index
    %c0_19 = arith.constant 0 : index
    %27 = vector.load %arg8[%c0_18, %c0_19] : memref<4x1xf32, #tpu.memory_space<vmem>>, vector<4x1xf32>
    tpu.vector_store %arg8[%c0_18, %c0_19], %26 {strides = array<i32>} : memref<4x1xf32, #tpu.memory_space<vmem>>, vector<4x1xf32>,
    return
  }
  func.func @transform_0(%arg0: i32) -> (i32, i32) {
    %c0_i32 = arith.constant 0 : i32
    %c0_i32_0 = arith.constant 0 : i32
    return %arg0, %c0_i32 : i32, i32
  }
  func.func @transform_1(%arg0: i32) -> (i32, i32) {
    %c0_i32 = arith.constant 0 : i32
    %c0_i32_0 = arith.constant 0 : i32
    %c0_i32_1 = arith.constant 0 : i32
    return %c0_i32, %c0_i32_0 : i32, i32
  }
  func.func @transform_2(%arg0: i32) -> (i32, i32) {
    %c0_i32 = arith.constant 0 : i32
    %c0_i32_0 = arith.constant 0 : i32
    %c0_i32_1 = arith.constant 0 : i32
    return %c0_i32, %c0_i32_0 : i32, i32
  }
  func.func @transform_3(%arg0: i32) -> (i32, i32) {
    %c0_i32 = arith.constant 0 : i32
    %c0_i32_0 = arith.constant 0 : i32
    %c0_i32_1 = arith.constant 0 : i32
    return %c0_i32, %c0_i32_0 : i32, i32
  }
  func.func @transform_4(%arg0: i32) -> (i32, i32) {
    %c0_i32 = arith.constant 0 : i32
    %c0_i32_0 = arith.constant 0 : i32
    %c0_i32_1 = arith.constant 0 : i32
    return %c0_i32, %c0_i32_0 : i32, i32
  }
  func.func @transform_5(%arg0: i32) -> (i32, i32) {
    %c0_i32 = arith.constant 0 : i32
    %c0_i32_0 = arith.constant 0 : i32
    %c0_i32_1 = arith.constant 0 : i32
    return %c0_i32, %c0_i32_0 : i32, i32
  }
  func.func @transform_6(%arg0: i32) -> (i32, i32) {
    %c0_i32 = arith.constant 0 : i32
    %c0_i32_0 = arith.constant 0 : i32
    %c0_i32_1 = arith.constant 0 : i32
    return %c0_i32, %c0_i32_0 : i32, i32
  }
  func.func @transform_7(%arg0: i32) -> (i32, i32) {
    %c0_i32 = arith.constant 0 : i32
    %c0_i32_0 = arith.constant 0 : i32
    return %arg0, %c0_i32 : i32, i32
  }
}

</mosaic_0001>

<llo_original>
// kernel: vanilla_d_forward.1
$region0: #{vanilla_d_forward.1}
  #allocation0 [shape = 'u32[]', space=smem, size = 0x4, offset = 0x4, fixed_abs, tag = 'smem constant byte address 0x4 - core index']
  #allocation1 [shape = 'u32[144,128]{1,0:T(1,128)}', space=vmem, size = 0x12000, scoped, tag = 'internal scratch']
  #allocation2 [shape = 'f32[1,1]{1,0:T(1,128)S(1)}', space=vmem, size = 0x200, scoped, tag = 'scoped memory for vanilla_d_forward.1']
  %s0 = inlined_call_operand.vmem [shape: f32[4,784], index: 0, kind: input, shape index: {}]
  %s1 = inlined_call_operand.hbm [shape: f32[784,256], index: 1, kind: input, shape index: {}]
  %s2 = inlined_call_operand.vmem [shape: f32[1,256], index: 2, kind: input, shape index: {}]
  %s3 = inlined_call_operand.vmem [shape: f32[256,256], index: 3, kind: input, shape index: {}]
  %s4 = inlined_call_operand.vmem [shape: f32[1,256], index: 4, kind: input, shape index: {}]
  %s5 = inlined_call_operand.vmem [shape: f32[256,1], index: 5, kind: input, shape index: {}]
  %s6 = inlined_call_operand.<no memory space> [shape: f32[1,1], index: 6, kind: input, shape index: {}]
  %s7 = inlined_call_operand.vmem [shape: f32[4,1], index: 7, kind: output, shape index: {}]
  %s8 = sld [smem:[#allocation0]]
  $region42: #{vanilla_d_forward.1} parent=0
    _
  %s10 = ssub.s32 1, %s8
  %s11 = scalar_select 0, %s10, %s8
  %v12 = vstv %s6
  %13 = vst [vmem:[#allocation2] sm:$0x1] %v12
  $region1: #{vanilla_d_forward.1} parent=0
    #allocation3 [shape = 'u8[802816]{0}', space=vmem, size = 0xc4000, scoped, tag = 'input window, operand 1, single buffered']
    #allocation4 [shape = 's32[1]{0}', space=sflag, size = 0x4, scoped, tag = 'scoped memory for vanilla_d_forward.1']
    %14 = vsyncpa [#allocation4], 0
    // Predicated region
    $region2: #{vanilla_d_forward.1} parent=1 // pred_check
      _
    $region3: #{vanilla_d_forward.1} parent=1 // pred_check_branch
      %16 = sbr.rel (0) target = $region5
    $region4: #{vanilla_d_forward.1} parent=1 // pred_region
      _
    $region5: #{vanilla_d_forward.1} parent=1 // pred_fallthru
      _
    // Predicated region
    $region6: #{vanilla_d_forward.1} parent=1 // pred_check
      _
    $region7: #{vanilla_d_forward.1} parent=1 // pred_check_branch
      %18 = sbr.rel (0) target = $region9
    $region8: #{vanilla_d_forward.1} parent=1 // pred_region
      %s20 = ssub.s32 25088, 25088
      %21 = vsyncadd [#allocation4], %s20
      %s22 = sshll.u32 [#allocation3], 4
      %s23 = int_to_ptr.vmem [resolvable:$true] %s22
      %28 = dma.hbm_to_vmem [thread:$0]  %s1, 25088, %s23, [#allocation4], 256, 256, 16
    $region9: #{vanilla_d_forward.1} parent=1 // pred_fallthru
      _
    // Predicated region
    $region10: #{vanilla_d_forward.1} parent=1 // pred_check
      _
    $region11: #{vanilla_d_forward.1} parent=1 // pred_check_branch
      %30 = sbr.rel (0) target = $region13
    $region12: #{vanilla_d_forward.1} parent=1 // pred_region
      _
    $region13: #{vanilla_d_forward.1} parent=1 // pred_fallthru
      _
    // Predicated region
    $region14: #{vanilla_d_forward.1} parent=1 // pred_check
      _
    $region15: #{vanilla_d_forward.1} parent=1 // pred_check_branch
      %32 = sbr.rel (0) target = $region17
    $region16: #{vanilla_d_forward.1} parent=1 // pred_region
      _
    $region17: #{vanilla_d_forward.1} parent=1 // pred_fallthru
      _
    // Predicated region
    $region18: #{vanilla_d_forward.1} parent=1 // pred_check
      _
    $region19: #{vanilla_d_forward.1} parent=1 // pred_check_branch
      %34 = sbr.rel (0) target = $region21
    $region20: #{vanilla_d_forward.1} parent=1 // pred_region
      _
    $region21: #{vanilla_d_forward.1} parent=1 // pred_fallthru
      _
    // Predicated region
    $region22: #{vanilla_d_forward.1} parent=1 // pred_check
      _
    $region23: #{vanilla_d_forward.1} parent=1 // pred_check_branch
      %36 = sbr.rel (0) target = $region25
    $region24: #{vanilla_d_forward.1} parent=1 // pred_region
      _
    $region25: #{vanilla_d_forward.1} parent=1 // pred_fallthru
      _
    // Predicated region
    $region26: #{vanilla_d_forward.1} parent=1 // pred_check
      _
    $region27: #{vanilla_d_forward.1} parent=1 // pred_check_branch
      %38 = sbr.rel (0) target = $region29
    $region28: #{vanilla_d_forward.1} parent=1 // pred_region
      _
    $region29: #{vanilla_d_forward.1} parent=1 // pred_fallthru
      _
    // Predicated region
    $region30: #{vanilla_d_forward.1} parent=1 // pred_check
      _
    $region31: #{vanilla_d_forward.1} parent=1 // pred_check_branch
      %40 = sbr.rel (0) target = $region33
    $region32: #{vanilla_d_forward.1} parent=1 // pred_region
      %41 = dma.done [#allocation4], 25088
    $region33: #{vanilla_d_forward.1} parent=1 // pred_fallthru
      _
    %v42 = vld [vmem:[%s0] sm:$0xff]
    %v43 = vld [vmem:[%s0 + $0x8] sm:$0xff]
    %v44 = vld [vmem:[%s0 + $0x10] sm:$0xff]
    %v45 = vld [vmem:[%s0 + $0x18] sm:$0xf]
    %v46 = vld [vmem:[#allocation3] sm:$0xff]
    %v47 = vld [vmem:[#allocation3 + $0x8] sm:$0xff]
    %v48 = vld [vmem:[#allocation3 + $0x10] sm:$0xff]
    %v49 = vld [vmem:[#allocation3 + $0x18] sm:$0xff]
    %v50 = vld [vmem:[#allocation3 + $0x20] sm:$0xff]
    %v51 = vld [vmem:[#allocation3 + $0x28] sm:$0xff]
    %v52 = vld [vmem:[#allocation3 + $0x30] sm:$0xff]
    %v53 = vld [vmem:[#allocation3 + $0x38] sm:$0xff]
    %v54 = vld [vmem:[#allocation3 + $0x40] sm:$0xff]
    %v55 = vld [vmem:[#allocation3 + $0x48] sm:$0xff]
    %v56 = vld [vmem:[#allocation3 + $0x50] sm:$0xff]
    %v57 = vld [vmem:[#allocation3 + $0x58] sm:$0xff]
    %v58 = vld [vmem:[#allocation3 + $0x60] sm:$0xff]
    %v59 = vld [vmem:[#allocation3 + $0x68] sm:$0xff]
    %v60 = vld [vmem:[#allocation3 + $0x70] sm:$0xff]
    %v61 = vld [vmem:[#allocation3 + $0x78] sm:$0xff]
    %v62 = vld [vmem:[#allocation3 + $0x80] sm:$0xff]
    %v63 = vld [vmem:[#allocation3 + $0x88] sm:$0xff]
    %v64 = vld [vmem:[#allocation3 + $0x90] sm:$0xff]
    %v65 = vld [vmem:[#allocation3 + $0x98] sm:$0xff]
    %v66 = vld [vmem:[#allocation3 + $0xa0] sm:$0xff]
    %v67 = vld [vmem:[#allocation3 + $0xa8] sm:$0xff]
    %v68 = vld [vmem:[#allocation3 + $0xb0] sm:$0xff]
    %v69 = vld [vmem:[#allocation3 + $0xb8] sm:$0xff]
    %v70 = vld [vmem:[#allocation3 + $0xc0] sm:$0xff]
    %v71 = vld [vmem:[#allocation3 + $0xc8] sm:$0xff]
    %v72 = vld [vmem:[#allocation3 + $0xd0] sm:$0xff]
    %v73 = vld [vmem:[#allocation3 + $0xd8] sm:$0xff]
    %v74 = vld [vmem:[#allocation3 + $0xe0] sm:$0xff]
    %v75 = vld [vmem:[#allocation3 + $0xe8] sm:$0xff]
    %v76 = vld [vmem:[#allocation3 + $0xf0] sm:$0xff]
    %v77 = vld [vmem:[#allocation3 + $0xf8] sm:$0xff]
    %v78 = vld [vmem:[#allocation3 + $0x100] sm:$0xff]
    %v79 = vld [vmem:[#allocation3 + $0x108] sm:$0xff]
    %v80 = vld [vmem:[#allocation3 + $0x110] sm:$0xff]
    %v81 = vld [vmem:[#allocation3 + $0x118] sm:$0xff]
    %v82 = vld [vmem:[#allocation3 + $0x120] sm:$0xff]
    %v83 = vld [vmem:[#allocation3 + $0x128] sm:$0xff]
    %v84 = vld [vmem:[#allocation3 + $0x130] sm:$0xff]
    %v85 = vld [vmem:[#allocation3 + $0x138] sm:$0xff]
    %v86 = vld [vmem:[#allocation3 + $0x140] sm:$0xff]
    %v87 = vld [vmem:[#allocation3 + $0x148] sm:$0xff]
    %v88 = vld [vmem:[#allocation3 + $0x150] sm:$0xff]
    %v89 = vld [vmem:[#allocation3 + $0x158] sm:$0xff]
    %v90 = vld [vmem:[#allocation3 + $0x160] sm:$0xff]
    %v91 = vld [vmem:[#allocation3 + $0x168] sm:$0xff]
    %v92 = vld [vmem:[#allocation3 + $0x170] sm:$0xff]
    %v93 = vld [vmem:[#allocation3 + $0x178] sm:$0xff]
    %v94 = vld [vmem:[#allocation3 + $0x180] sm:$0xff]
    %v95 = vld [vmem:[#allocation3 + $0x188] sm:$0xff]
    %v96 = vld [vmem:[#allocation3 + $0x190] sm:$0xff]
    %v97 = vld [vmem:[#allocation3 + $0x198] sm:$0xff]
    %v98 = vld [vmem:[#allocation3 + $0x1a0] sm:$0xff]
    %v99 = vld [vmem:[#allocation3 + $0x1a8] sm:$0xff]
    %v100 = vld [vmem:[#allocation3 + $0x1b0] sm:$0xff]
    %v101 = vld [vmem:[#allocation3 + $0x1b8] sm:$0xff]
    %v102 = vld [vmem:[#allocation3 + $0x1c0] sm:$0xff]
    %v103 = vld [vmem:[#allocation3 + $0x1c8] sm:$0xff]
    %v104 = vld [vmem:[#allocation3 + $0x1d0] sm:$0xff]
    %v105 = vld [vmem:[#allocation3 + $0x1d8] sm:$0xff]
    %v106 = vld [vmem:[#allocation3 + $0x1e0] sm:$0xff]
    %v107 = vld [vmem:[#allocation3 + $0x1e8] sm:$0xff]
    %v108 = vld [vmem:[#allocation3 + $0x1f0] sm:$0xff]
    %v109 = vld [vmem:[#allocation3 + $0x1f8] sm:$0xff]
    %v110 = vld [vmem:[#allocation3 + $0x200] sm:$0xff]
    %v111 = vld [vmem:[#allocation3 + $0x208] sm:$0xff]
    %v112 = vld [vmem:[#allocation3 + $0x210] sm:$0xff]
    %v113 = vld [vmem:[#allocation3 + $0x218] sm:$0xff]
    %v114 = vld [vmem:[#allocation3 + $0x220] sm:$0xff]
    %v115 = vld [vmem:[#allocation3 + $0x228] sm:$0xff]
    %v116 = vld [vmem:[#allocation3 + $0x230] sm:$0xff]
    %v117 = vld [vmem:[#allocation3 + $0x238] sm:$0xff]
    %v118 = vld [vmem:[#allocation3 + $0x240] sm:$0xff]
    %v119 = vld [vmem:[#allocation3 + $0x248] sm:$0xff]
    %v120 = vld [vmem:[#allocation3 + $0x250] sm:$0xff]
    %v121 = vld [vmem:[#allocation3 + $0x258] sm:$0xff]
    %v122 = vld [vmem:[#allocation3 + $0x260] sm:$0xff]
    %v123 = vld [vmem:[#allocation3 + $0x268] sm:$0xff]
    %v124 = vld [vmem:[#allocation3 + $0x270] sm:$0xff]
    %v125 = vld [vmem:[#allocation3 + $0x278] sm:$0xff]
    %v126 = vld [vmem:[#allocation3 + $0x280] sm:$0xff]
    %v127 = vld [vmem:[#allocation3 + $0x288] sm:$0xff]
    %v128 = vld [vmem:[#allocation3 + $0x290] sm:$0xff]
    %v129 = vld [vmem:[#allocation3 + $0x298] sm:$0xff]
    %v130 = vld [vmem:[#allocation3 + $0x2a0] sm:$0xff]
    %v131 = vld [vmem:[#allocation3 + $0x2a8] sm:$0xff]
    %v132 = vld [vmem:[#allocation3 + $0x2b0] sm:$0xff]
    %v133 = vld [vmem:[#allocation3 + $0x2b8] sm:$0xff]
    %v134 = vld [vmem:[#allocation3 + $0x2c0] sm:$0xff]
    %v135 = vld [vmem:[#allocation3 + $0x2c8] sm:$0xff]
    %v136 = vld [vmem:[#allocation3 + $0x2d0] sm:$0xff]
    %v137 = vld [vmem:[#allocation3 + $0x2d8] sm:$0xff]
    %v138 = vld [vmem:[#allocation3 + $0x2e0] sm:$0xff]
    %v139 = vld [vmem:[#allocation3 + $0x2e8] sm:$0xff]
    %v140 = vld [vmem:[#allocation3 + $0x2f0] sm:$0xff]
    %v141 = vld [vmem:[#allocation3 + $0x2f8] sm:$0xff]
    %v142 = vld [vmem:[#allocation3 + $0x300] sm:$0xff]
    %v143 = vld [vmem:[#allocation3 + $0x308] sm:$0xff]
    %v144 = vld [vmem:[#allocation3 + $0x310] sm:$0xff]
    %v145 = vld [vmem:[#allocation3 + $0x318] sm:$0xff]
    %v146 = vld [vmem:[#allocation3 + $0x320] sm:$0xff]
    %v147 = vld [vmem:[#allocation3 + $0x328] sm:$0xff]
    %v148 = vld [vmem:[#allocation3 + $0x330] sm:$0xff]
    %v149 = vld [vmem:[#allocation3 + $0x338] sm:$0xff]
    %v150 = vld [vmem:[#allocation3 + $0x340] sm:$0xff]
    %v151 = vld [vmem:[#allocation3 + $0x348] sm:$0xff]
    %v152 = vld [vmem:[#allocation3 + $0x350] sm:$0xff]
    %v153 = vld [vmem:[#allocation3 + $0x358] sm:$0xff]
    %v154 = vld [vmem:[#allocation3 + $0x360] sm:$0xff]
    %v155 = vld [vmem:[#allocation3 + $0x368] sm:$0xff]
    %v156 = vld [vmem:[#allocation3 + $0x370] sm:$0xff]
    %v157 = vld [vmem:[#allocation3 + $0x378] sm:$0xff]
    %v158 = vld [vmem:[#allocation3 + $0x380] sm:$0xff]
    %v159 = vld [vmem:[#allocation3 + $0x388] sm:$0xff]
    %v160 = vld [vmem:[#allocation3 + $0x390] sm:$0xff]
    %v161 = vld [vmem:[#allocation3 + $0x398] sm:$0xff]
    %v162 = vld [vmem:[#allocation3 + $0x3a0] sm:$0xff]
    %v163 = vld [vmem:[#allocation3 + $0x3a8] sm:$0xff]
    %v164 = vld [vmem:[#allocation3 + $0x3b0] sm:$0xff]
    %v165 = vld [vmem:[#allocation3 + $0x3b8] sm:$0xff]
    %v166 = vld [vmem:[#allocation3 + $0x3c0] sm:$0xff]
    %v167 = vld [vmem:[#allocation3 + $0x3c8] sm:$0xff]
    %v168 = vld [vmem:[#allocation3 + $0x3d0] sm:$0xff]
    %v169 = vld [vmem:[#allocation3 + $0x3d8] sm:$0xff]
    %v170 = vld [vmem:[#allocation3 + $0x3e0] sm:$0xff]
    %v171 = vld [vmem:[#allocation3 + $0x3e8] sm:$0xff]
    %v172 = vld [vmem:[#allocation3 + $0x3f0] sm:$0xff]
    %v173 = vld [vmem:[#allocation3 + $0x3f8] sm:$0xff]
    %v174 = vld [vmem:[#allocation3 + $0x400] sm:$0xff]
    %v175 = vld [vmem:[#allocation3 + $0x408] sm:$0xff]
    %v176 = vld [vmem:[#allocation3 + $0x410] sm:$0xff]
    %v177 = vld [vmem:[#allocation3 + $0x418] sm:$0xff]
    %v178 = vld [vmem:[#allocation3 + $0x420] sm:$0xff]
    %v179 = vld [vmem:[#allocation3 + $0x428] sm:$0xff]
    %v180 = vld [vmem:[#allocation3 + $0x430] sm:$0xff]
    %v181 = vld [vmem:[#allocation3 + $0x438] sm:$0xff]
    %v182 = vld [vmem:[#allocation3 + $0x440] sm:$0xff]
    %v183 = vld [vmem:[#allocation3 + $0x448] sm:$0xff]
    %v184 = vld [vmem:[#allocation3 + $0x450] sm:$0xff]
    %v185 = vld [vmem:[#allocation3 + $0x458] sm:$0xff]
    %v186 = vld [vmem:[#allocation3 + $0x460] sm:$0xff]
    %v187 = vld [vmem:[#allocation3 + $0x468] sm:$0xff]
    %v188 = vld [vmem:[#allocation3 + $0x470] sm:$0xff]
    %v189 = vld [vmem:[#allocation3 + $0x478] sm:$0xff]
    %v190 = vld [vmem:[#allocation3 + $0x480] sm:$0xff]
    %v191 = vld [vmem:[#allocation3 + $0x488] sm:$0xff]
    %v192 = vld [vmem:[#allocation3 + $0x490] sm:$0xff]
    %v193 = vld [vmem:[#allocation3 + $0x498] sm:$0xff]
    %v194 = vld [vmem:[#allocation3 + $0x4a0] sm:$0xff]
    %v195 = vld [vmem:[#allocation3 + $0x4a8] sm:$0xff]
    %v196 = vld [vmem:[#allocation3 + $0x4b0] sm:$0xff]
    %v197 = vld [vmem:[#allocation3 + $0x4b8] sm:$0xff]
    %v198 = vld [vmem:[#allocation3 + $0x4c0] sm:$0xff]
    %v199 = vld [vmem:[#allocation3 + $0x4c8] sm:$0xff]
    %v200 = vld [vmem:[#allocation3 + $0x4d0] sm:$0xff]
    %v201 = vld [vmem:[#allocation3 + $0x4d8] sm:$0xff]
    %v202 = vld [vmem:[#allocation3 + $0x4e0] sm:$0xff]
    %v203 = vld [vmem:[#allocation3 + $0x4e8] sm:$0xff]
    %v204 = vld [vmem:[#allocation3 + $0x4f0] sm:$0xff]
    %v205 = vld [vmem:[#allocation3 + $0x4f8] sm:$0xff]
    %v206 = vld [vmem:[#allocation3 + $0x500] sm:$0xff]
    %v207 = vld [vmem:[#allocation3 + $0x508] sm:$0xff]
    %v208 = vld [vmem:[#allocation3 + $0x510] sm:$0xff]
    %v209 = vld [vmem:[#allocation3 + $0x518] sm:$0xff]
    %v210 = vld [vmem:[#allocation3 + $0x520] sm:$0xff]
    %v211 = vld [vmem:[#allocation3 + $0x528] sm:$0xff]
    %v212 = vld [vmem:[#allocation3 + $0x530] sm:$0xff]
    %v213 = vld [vmem:[#allocation3 + $0x538] sm:$0xff]
    %v214 = vld [vmem:[#allocation3 + $0x540] sm:$0xff]
    %v215 = vld [vmem:[#allocation3 + $0x548] sm:$0xff]
    %v216 = vld [vmem:[#allocation3 + $0x550] sm:$0xff]
    %v217 = vld [vmem:[#allocation3 + $0x558] sm:$0xff]
    %v218 = vld [vmem:[#allocation3 + $0x560] sm:$0xff]
    %v219 = vld [vmem:[#allocation3 + $0x568] sm:$0xff]
    %v220 = vld [vmem:[#allocation3 + $0x570] sm:$0xff]
    %v221 = vld [vmem:[#allocation3 + $0x578] sm:$0xff]
    %v222 = vld [vmem:[#allocation3 + $0x580] sm:$0xff]
    %v223 = vld [vmem:[#allocation3 + $0x588] sm:$0xff]
    %v224 = vld [vmem:[#allocation3 + $0x590] sm:$0xff]
    %v225 = vld [vmem:[#allocation3 + $0x598] sm:$0xff]
    %v226 = vld [vmem:[#allocation3 + $0x5a0] sm:$0xff]
    %v227 = vld [vmem:[#allocation3 + $0x5a8] sm:$0xff]
    %v228 = vld [vmem:[#allocation3 + $0x5b0] sm:$0xff]
    %v229 = vld [vmem:[#allocation3 + $0x5b8] sm:$0xff]
    %v230 = vld [vmem:[#allocation3 + $0x5c0] sm:$0xff]
    %v231 = vld [vmem:[#allocation3 + $0x5c8] sm:$0xff]
    %v232 = vld [vmem:[#allocation3 + $0x5d0] sm:$0xff]
    %v233 = vld [vmem:[#allocation3 + $0x5d8] sm:$0xff]
    %v234 = vld [vmem:[#allocation3 + $0x5e0] sm:$0xff]
    %v235 = vld [vmem:[#allocation3 + $0x5e8] sm:$0xff]
    %v236 = vld [vmem:[#allocation3 + $0x5f0] sm:$0xff]
    %v237 = vld [vmem:[#allocation3 + $0x5f8] sm:$0xff]
    %v238 = vld [vmem:[#allocation3 + $0x600] sm:$0xff]
    %v239 = vld [vmem:[#allocation3 + $0x608] sm:$0xff]
    %v240 = vld [vmem:[#allocation3 + $0x610] sm:$0xff]
    %v241 = vld [vmem:[#allocation3 + $0x618] sm:$0xff]
    %v242 = vld [vmem:[%s2] sm:$0x3]
    %v244 = vlaneseq
    %v245 = vshrl.u32 %v244, 7
    %v246 = vsub.s32 0, %v245
    %v247 = vrot.slane %v242, %v246
    %v248 = vlaneseq
    %v249 = vshrl.u32 %v248, 7
    %v250 = vsub.s32 1, %v249
    %v251 = vrot.slane %v242, %v250
    %v258 = vcombine.high %v42, %v42
    %v259 = vcombine.high %v43, %v43
    %v260 = vcombine.high %v44, %v44
    %vm264 = vcmask 130048
    %v265 = vsel %vm264, %v45, 0
    %267 = vmatprep.subr.mxu0 %v47
    %268 = vmatpush1.msra.mxu0 %v46
    %269 = vmatprep.subr.mxu0 %v49
    %270 = vmatpush1.msra.mxu0 %v48
    %271 = vmatprep.subr.mxu0 %v51
    %272 = vmatpush1.msra.mxu0 %v50
    %273 = vmatprep.subr.mxu0 %v53
    %274 = vmatpush1.msra.mxu0 %v52
    %275 = vmatprep.subr.mxu0 %v55
    %276 = vmatpush1.msra.mxu0 %v54
    %277 = vmatprep.subr.mxu0 %v57
    %278 = vmatpush1.msra.mxu0 %v56
    %279 = vmatprep.subr.mxu0 %v59
    %280 = vmatpush1.msra.mxu0 %v58
    %281 = vmatprep.subr.mxu0 %v61
    %282 = vmatpush1.msra.mxu0 %v60
    %283 = vmatprep.subr.mxu0 %v63
    %284 = vmatpush1.msra.mxu0 %v62
    %285 = vmatprep.subr.mxu0 %v65
    %286 = vmatpush1.msra.mxu0 %v64
    %287 = vmatprep.subr.mxu0 %v67
    %288 = vmatpush1.msra.mxu0 %v66
    %289 = vmatprep.subr.mxu0 %v69
    %290 = vmatpush1.msra.mxu0 %v68
    %291 = vmatprep.subr.mxu0 %v71
    %292 = vmatpush1.msra.mxu0 %v70
    %293 = vmatprep.subr.mxu0 %v73
    %294 = vmatpush1.msra.mxu0 %v72
    %295 = vmatprep.subr.mxu0 %v75
    %296 = vmatpush1.msra.mxu0 %v74
    %297 = vmatprep.subr.mxu0 %v77
    %298 = vmatpush1.msra.mxu0 %v76
    %299 = vmatprep.subr.mxu0 %v79
    %300 = vmatpush1.msra.mxu0 %v78
    %301 = vmatprep.subr.mxu0 %v81
    %302 = vmatpush1.msra.mxu0 %v80
    %303 = vmatprep.subr.mxu0 %v83
    %304 = vmatpush1.msra.mxu0 %v82
    %305 = vmatprep.subr.mxu0 %v85
    %306 = vmatpush1.msra.mxu0 %v84
    %307 = vmatprep.subr.mxu0 %v87
    %308 = vmatpush1.msra.mxu0 %v86
    %309 = vmatprep.subr.mxu0 %v89
    %310 = vmatpush1.msra.mxu0 %v88
    %311 = vmatprep.subr.mxu0 %v91
    %312 = vmatpush1.msra.mxu0 %v90
    %313 = vmatprep.subr.mxu0 %v93
    %314 = vmatpush1.msra.mxu0 %v92
    %315 = vmatprep.subr.mxu0 %v95
    %316 = vmatpush1.msra.mxu0 %v94
    %317 = vmatprep.subr.mxu0 %v97
    %318 = vmatpush1.msra.mxu0 %v96
    %319 = vmatprep.subr.mxu0 %v99
    %320 = vmatpush1.msra.mxu0 %v98
    %321 = vmatprep.subr.mxu0 %v101
    %322 = vmatpush1.msra.mxu0 %v100
    %323 = vmatprep.subr.mxu0 %v103
    %324 = vmatpush1.msra.mxu0 %v102
    %325 = vmatprep.subr.mxu0 %v105
    %326 = vmatpush1.msra.mxu0 %v104
    %327 = vmatprep.subr.mxu0 %v107
    %328 = vmatpush1.msra.mxu0 %v106
    %329 = vmatprep.subr.mxu0 %v109
    %330 = vmatpush1.msra.mxu0 %v108
    %331 = vmatprep.mubr.f32.mxu0 %v258
    %332 = vmatmul.mubr.f32.gmra.mrb[0].mxu0 %v42
    %v333 = vpop.f32.mrb[0].mxu0
    %v334 = vadd.f32 %v247, %v333
    %v335 = vpop.f32.mrb[0].mxu0
    %v336 = vadd.f32 %v251, %v335
    %337 = vdwg.mxu0
    %338 = vmatprep.subr.mxu0 %v111
    %339 = vmatpush1.msra.mxu0 %v110
    %340 = vmatprep.subr.mxu0 %v113
    %341 = vmatpush1.msra.mxu0 %v112
    %342 = vmatprep.subr.mxu0 %v115
    %343 = vmatpush1.msra.mxu0 %v114
    %344 = vmatprep.subr.mxu0 %v117
    %345 = vmatpush1.msra.mxu0 %v116
    %346 = vmatprep.subr.mxu0 %v119
    %347 = vmatpush1.msra.mxu0 %v118
    %348 = vmatprep.subr.mxu0 %v121
    %349 = vmatpush1.msra.mxu0 %v120
    %350 = vmatprep.subr.mxu0 %v123
    %351 = vmatpush1.msra.mxu0 %v122
    %352 = vmatprep.subr.mxu0 %v125
    %353 = vmatpush1.msra.mxu0 %v124
    %354 = vmatprep.subr.mxu0 %v127
    %355 = vmatpush1.msra.mxu0 %v126
    %356 = vmatprep.subr.mxu0 %v129
    %357 = vmatpush1.msra.mxu0 %v128
    %358 = vmatprep.subr.mxu0 %v131
    %359 = vmatpush1.msra.mxu0 %v130
    %360 = vmatprep.subr.mxu0 %v133
    %361 = vmatpush1.msra.mxu0 %v132
    %362 = vmatprep.subr.mxu0 %v135
    %363 = vmatpush1.msra.mxu0 %v134
    %364 = vmatprep.subr.mxu0 %v137
    %365 = vmatpush1.msra.mxu0 %v136
    %366 = vmatprep.subr.mxu0 %v139
    %367 = vmatpush1.msra.mxu0 %v138
    %368 = vmatprep.subr.mxu0 %v141
    %369 = vmatpush1.msra.mxu0 %v140
    %370 = vmatprep.subr.mxu0 %v143
    %371 = vmatpush1.msra.mxu0 %v142
    %372 = vmatprep.subr.mxu0 %v145
    %373 = vmatpush1.msra.mxu0 %v144
    %374 = vmatprep.subr.mxu0 %v147
    %375 = vmatpush1.msra.mxu0 %v146
    %376 = vmatprep.subr.mxu0 %v149
    %377 = vmatpush1.msra.mxu0 %v148
    %378 = vmatprep.subr.mxu0 %v151
    %379 = vmatpush1.msra.mxu0 %v150
    %380 = vmatprep.subr.mxu0 %v153
    %381 = vmatpush1.msra.mxu0 %v152
    %382 = vmatprep.subr.mxu0 %v155
    %383 = vmatpush1.msra.mxu0 %v154
    %384 = vmatprep.subr.mxu0 %v157
    %385 = vmatpush1.msra.mxu0 %v156
    %386 = vmatprep.subr.mxu0 %v159
    %387 = vmatpush1.msra.mxu0 %v158
    %388 = vmatprep.subr.mxu0 %v161
    %389 = vmatpush1.msra.mxu0 %v160
    %390 = vmatprep.subr.mxu0 %v163
    %391 = vmatpush1.msra.mxu0 %v162
    %392 = vmatprep.subr.mxu0 %v165
    %393 = vmatpush1.msra.mxu0 %v164
    %394 = vmatprep.subr.mxu0 %v167
    %395 = vmatpush1.msra.mxu0 %v166
    %396 = vmatprep.subr.mxu0 %v169
    %397 = vmatpush1.msra.mxu0 %v168
    %398 = vmatprep.subr.mxu0 %v171
    %399 = vmatpush1.msra.mxu0 %v170
    %400 = vmatprep.subr.mxu0 %v173
    %401 = vmatpush1.msra.mxu0 %v172
    %402 = vmatprep.mubr.f32.mxu0 %v259
    %403 = vmatmul.mubr.f32.gmra.mrb[0].mxu0 %v43
    %v404 = vpop.f32.mrb[0].mxu0
    %v405 = vadd.f32 %v334, %v404
    %v406 = vpop.f32.mrb[0].mxu0
    %v407 = vadd.f32 %v336, %v406
    %408 = vdwg.mxu0
    %409 = vmatprep.subr.mxu0 %v175
    %410 = vmatpush1.msra.mxu0 %v174
    %411 = vmatprep.subr.mxu0 %v177
    %412 = vmatpush1.msra.mxu0 %v176
    %413 = vmatprep.subr.mxu0 %v179
    %414 = vmatpush1.msra.mxu0 %v178
    %415 = vmatprep.subr.mxu0 %v181
    %416 = vmatpush1.msra.mxu0 %v180
    %417 = vmatprep.subr.mxu0 %v183
    %418 = vmatpush1.msra.mxu0 %v182
    %419 = vmatprep.subr.mxu0 %v185
    %420 = vmatpush1.msra.mxu0 %v184
    %421 = vmatprep.subr.mxu0 %v187
    %422 = vmatpush1.msra.mxu0 %v186
    %423 = vmatprep.subr.mxu0 %v189
    %424 = vmatpush1.msra.mxu0 %v188
    %425 = vmatprep.subr.mxu0 %v191
    %426 = vmatpush1.msra.mxu0 %v190
    %427 = vmatprep.subr.mxu0 %v193
    %428 = vmatpush1.msra.mxu0 %v192
    %429 = vmatprep.subr.mxu0 %v195
    %430 = vmatpush1.msra.mxu0 %v194
    %431 = vmatprep.subr.mxu0 %v197
    %432 = vmatpush1.msra.mxu0 %v196
    %433 = vmatprep.subr.mxu0 %v199
    %434 = vmatpush1.msra.mxu0 %v198
    %435 = vmatprep.subr.mxu0 %v201
    %436 = vmatpush1.msra.mxu0 %v200
    %437 = vmatprep.subr.mxu0 %v203
    %438 = vmatpush1.msra.mxu0 %v202
    %439 = vmatprep.subr.mxu0 %v205
    %440 = vmatpush1.msra.mxu0 %v204
    %441 = vmatprep.subr.mxu0 %v207
    %442 = vmatpush1.msra.mxu0 %v206
    %443 = vmatprep.subr.mxu0 %v209
    %444 = vmatpush1.msra.mxu0 %v208
    %445 = vmatprep.subr.mxu0 %v211
    %446 = vmatpush1.msra.mxu0 %v210
    %447 = vmatprep.subr.mxu0 %v213
    %448 = vmatpush1.msra.mxu0 %v212
    %449 = vmatprep.subr.mxu0 %v215
    %450 = vmatpush1.msra.mxu0 %v214
    %451 = vmatprep.subr.mxu0 %v217
    %452 = vmatpush1.msra.mxu0 %v216
    %453 = vmatprep.subr.mxu0 %v219
    %454 = vmatpush1.msra.mxu0 %v218
    %455 = vmatprep.subr.mxu0 %v221
    %456 = vmatpush1.msra.mxu0 %v220
    %457 = vmatprep.subr.mxu0 %v223
    %458 = vmatpush1.msra.mxu0 %v222
    %459 = vmatprep.subr.mxu0 %v225
    %460 = vmatpush1.msra.mxu0 %v224
    %461 = vmatprep.subr.mxu0 %v227
    %462 = vmatpush1.msra.mxu0 %v226
    %463 = vmatprep.subr.mxu0 %v229
    %464 = vmatpush1.msra.mxu0 %v228
    %465 = vmatprep.subr.mxu0 %v231
    %466 = vmatpush1.msra.mxu0 %v230
    %467 = vmatprep.subr.mxu0 %v233
    %468 = vmatpush1.msra.mxu0 %v232
    %469 = vmatprep.subr.mxu0 %v235
    %470 = vmatpush1.msra.mxu0 %v234
    %471 = vmatprep.subr.mxu0 %v237
    %472 = vmatpush1.msra.mxu0 %v236
    %473 = vmatprep.mubr.f32.mxu0 %v260
    %474 = vmatmul.mubr.f32.gmra.mrb[0].mxu0 %v44
    %v475 = vpop.f32.mrb[0].mxu0
    %v476 = vadd.f32 %v405, %v475
    %v477 = vpop.f32.mrb[0].mxu0
    %v478 = vadd.f32 %v407, %v477
    %479 = vdwg.mxu0
    %480 = vmatprep.subr.mxu0 %v239
    %481 = vmatpush1.msra.mxu0 %v238
    %482 = vmatprep.subr.mxu0 %v241
    %483 = vmatpush1.msra.mxu0 %v240
    %484 = vmatprep.subr.mxu0 0.0
    %485 = vmatpush1.msra.mxu0 0.0
    %486 = vmatprep.subr.mxu0 0.0
    %487 = vmatpush1.msra.mxu0 0.0
    %488 = vmatprep.subr.mxu0 0.0
    %489 = vmatpush1.msra.mxu0 0.0
    %490 = vmatprep.subr.mxu0 0.0
    %491 = vmatpush1.msra.mxu0 0.0
    %492 = vmatprep.subr.mxu0 0.0
    %493 = vmatpush1.msra.mxu0 0.0
    %494 = vmatprep.subr.mxu0 0.0
    %495 = vmatpush1.msra.mxu0 0.0
    %496 = vmatprep.subr.mxu0 0.0
    %497 = vmatpush1.msra.mxu0 0.0
    %498 = vmatprep.subr.mxu0 0.0
    %499 = vmatpush1.msra.mxu0 0.0
    %500 = vmatprep.subr.mxu0 0.0
    %501 = vmatpush1.msra.mxu0 0.0
    %502 = vmatprep.subr.mxu0 0.0
    %503 = vmatpush1.msra.mxu0 0.0
    %504 = vmatprep.subr.mxu0 0.0
    %505 = vmatpush1.msra.mxu0 0.0
    %506 = vmatprep.subr.mxu0 0.0
    %507 = vmatpush1.msra.mxu0 0.0
    %508 = vmatprep.subr.mxu0 0.0
    %509 = vmatpush1.msra.mxu0 0.0
    %510 = vmatprep.subr.mxu0 0.0
    %511 = vmatpush1.msra.mxu0 0.0
    %512 = vmatprep.subr.mxu0 0.0
    %513 = vmatpush1.msra.mxu0 0.0
    %514 = vmatprep.subr.mxu0 0.0
    %515 = vmatpush1.msra.mxu0 0.0
    %516 = vmatprep.subr.mxu0 0.0
    %517 = vmatpush1.msra.mxu0 0.0
    %518 = vmatprep.subr.mxu0 0.0
    %519 = vmatpush1.msra.mxu0 0.0
    %520 = vmatprep.subr.mxu0 0.0
    %521 = vmatpush1.msra.mxu0 0.0
    %522 = vmatprep.subr.mxu0 0.0
    %523 = vmatpush1.msra.mxu0 0.0
    %524 = vmatprep.subr.mxu0 0.0
    %525 = vmatpush1.msra.mxu0 0.0
    %526 = vmatprep.subr.mxu0 0.0
    %527 = vmatpush1.msra.mxu0 0.0
    %528 = vmatprep.subr.mxu0 0.0
    %529 = vmatpush1.msra.mxu0 0.0
    %530 = vmatprep.subr.mxu0 0.0
    %531 = vmatpush1.msra.mxu0 0.0
    %532 = vmatprep.subr.mxu0 0.0
    %533 = vmatpush1.msra.mxu0 0.0
    %534 = vmatprep.subr.mxu0 0.0
    %535 = vmatpush1.msra.mxu0 0.0
    %536 = vmatprep.subr.mxu0 0.0
    %537 = vmatpush1.msra.mxu0 0.0
    %538 = vmatprep.subr.mxu0 0.0
    %539 = vmatpush1.msra.mxu0 0.0
    %540 = vmatprep.subr.mxu0 0.0
    %541 = vmatpush1.msra.mxu0 0.0
    %542 = vmatprep.subr.mxu0 0.0
    %543 = vmatpush1.msra.mxu0 0.0
    %544 = vmatprep.mubr.f32.mxu0 0.0
    %545 = vmatmul.mubr.f32.gmra.mrb[0].mxu0 %v265
    %v546 = vpop.f32.mrb[0].mxu0
    %v547 = vadd.f32 %v476, %v546
    %v548 = vpop.f32.mrb[0].mxu0
    %v549 = vadd.f32 %v478, %v548
    %550 = vdwg.mxu0
    %v551 = vmul.f32 %v547, 0.2
    %v552 = vmul.f32 %v549, 0.2
    %v553 = vmax.f32 %v547, %v551
    %v554 = vmax.f32 %v549, %v552
    %v555 = vld [vmem:[%s3] sm:$0xff]
    %v556 = vld [vmem:[%s3 + $0x8] sm:$0xff]
    %v557 = vld [vmem:[%s3 + $0x10] sm:$0xff]
    %v558 = vld [vmem:[%s3 + $0x18] sm:$0xff]
    %v559 = vld [vmem:[%s3 + $0x20] sm:$0xff]
    %v560 = vld [vmem:[%s3 + $0x28] sm:$0xff]
    %v561 = vld [vmem:[%s3 + $0x30] sm:$0xff]
    %v562 = vld [vmem:[%s3 + $0x38] sm:$0xff]
    %v563 = vld [vmem:[%s3 + $0x40] sm:$0xff]
    %v564 = vld [vmem:[%s3 + $0x48] sm:$0xff]
    %v565 = vld [vmem:[%s3 + $0x50] sm:$0xff]
    %v566 = vld [vmem:[%s3 + $0x58] sm:$0xff]
    %v567 = vld [vmem:[%s3 + $0x60] sm:$0xff]
    %v568 = vld [vmem:[%s3 + $0x68] sm:$0xff]
    %v569 = vld [vmem:[%s3 + $0x70] sm:$0xff]
    %v570 = vld [vmem:[%s3 + $0x78] sm:$0xff]
    %v571 = vld [vmem:[%s3 + $0x80] sm:$0xff]
    %v572 = vld [vmem:[%s3 + $0x88] sm:$0xff]
    %v573 = vld [vmem:[%s3 + $0x90] sm:$0xff]
    %v574 = vld [vmem:[%s3 + $0x98] sm:$0xff]
    %v575 = vld [vmem:[%s3 + $0xa0] sm:$0xff]
    %v576 = vld [vmem:[%s3 + $0xa8] sm:$0xff]
    %v577 = vld [vmem:[%s3 + $0xb0] sm:$0xff]
    %v578 = vld [vmem:[%s3 + $0xb8] sm:$0xff]
    %v579 = vld [vmem:[%s3 + $0xc0] sm:$0xff]
    %v580 = vld [vmem:[%s3 + $0xc8] sm:$0xff]
    %v581 = vld [vmem:[%s3 + $0xd0] sm:$0xff]
    %v582 = vld [vmem:[%s3 + $0xd8] sm:$0xff]
    %v583 = vld [vmem:[%s3 + $0xe0] sm:$0xff]
    %v584 = vld [vmem:[%s3 + $0xe8] sm:$0xff]
    %v585 = vld [vmem:[%s3 + $0xf0] sm:$0xff]
    %v586 = vld [vmem:[%s3 + $0xf8] sm:$0xff]
    %v587 = vld [vmem:[%s3 + $0x100] sm:$0xff]
    %v588 = vld [vmem:[%s3 + $0x108] sm:$0xff]
    %v589 = vld [vmem:[%s3 + $0x110] sm:$0xff]
    %v590 = vld [vmem:[%s3 + $0x118] sm:$0xff]
    %v591 = vld [vmem:[%s3 + $0x120] sm:$0xff]
    %v592 = vld [vmem:[%s3 + $0x128] sm:$0xff]
    %v593 = vld [vmem:[%s3 + $0x130] sm:$0xff]
    %v594 = vld [vmem:[%s3 + $0x138] sm:$0xff]
    %v595 = vld [vmem:[%s3 + $0x140] sm:$0xff]
    %v596 = vld [vmem:[%s3 + $0x148] sm:$0xff]
    %v597 = vld [vmem:[%s3 + $0x150] sm:$0xff]
    %v598 = vld [vmem:[%s3 + $0x158] sm:$0xff]
    %v599 = vld [vmem:[%s3 + $0x160] sm:$0xff]
    %v600 = vld [vmem:[%s3 + $0x168] sm:$0xff]
    %v601 = vld [vmem:[%s3 + $0x170] sm:$0xff]
    %v602 = vld [vmem:[%s3 + $0x178] sm:$0xff]
    %v603 = vld [vmem:[%s3 + $0x180] sm:$0xff]
    %v604 = vld [vmem:[%s3 + $0x188] sm:$0xff]
    %v605 = vld [vmem:[%s3 + $0x190] sm:$0xff]
    %v606 = vld [vmem:[%s3 + $0x198] sm:$0xff]
    %v607 = vld [vmem:[%s3 + $0x1a0] sm:$0xff]
    %v608 = vld [vmem:[%s3 + $0x1a8] sm:$0xff]
    %v609 = vld [vmem:[%s3 + $0x1b0] sm:$0xff]
    %v610 = vld [vmem:[%s3 + $0x1b8] sm:$0xff]
    %v611 = vld [vmem:[%s3 + $0x1c0] sm:$0xff]
    %v612 = vld [vmem:[%s3 + $0x1c8] sm:$0xff]
    %v613 = vld [vmem:[%s3 + $0x1d0] sm:$0xff]
    %v614 = vld [vmem:[%s3 + $0x1d8] sm:$0xff]
    %v615 = vld [vmem:[%s3 + $0x1e0] sm:$0xff]
    %v616 = vld [vmem:[%s3 + $0x1e8] sm:$0xff]
    %v617 = vld [vmem:[%s3 + $0x1f0] sm:$0xff]
    %v618 = vld [vmem:[%s3 + $0x1f8] sm:$0xff]
    %v619 = vld [vmem:[%s4] sm:$0x3]
    %v621 = vlaneseq
    %v622 = vshrl.u32 %v621, 7
    %v623 = vsub.s32 0, %v622
    %v624 = vrot.slane %v619, %v623
    %v625 = vlaneseq
    %v626 = vshrl.u32 %v625, 7
    %v627 = vsub.s32 1, %v626
    %v628 = vrot.slane %v619, %v627
    %631 = vmatprep.subr.mxu0 %v556
    %632 = vmatpush1.msra.mxu0 %v555
    %633 = vmatprep.subr.mxu0 %v558
    %634 = vmatpush1.msra.mxu0 %v557
    %635 = vmatprep.subr.mxu0 %v560
    %636 = vmatpush1.msra.mxu0 %v559
    %637 = vmatprep.subr.mxu0 %v562
    %638 = vmatpush1.msra.mxu0 %v561
    %639 = vmatprep.subr.mxu0 %v564
    %640 = vmatpush1.msra.mxu0 %v563
    %641 = vmatprep.subr.mxu0 %v566
    %642 = vmatpush1.msra.mxu0 %v565
    %643 = vmatprep.subr.mxu0 %v568
    %644 = vmatpush1.msra.mxu0 %v567
    %645 = vmatprep.subr.mxu0 %v570
    %646 = vmatpush1.msra.mxu0 %v569
    %647 = vmatprep.subr.mxu0 %v572
    %648 = vmatpush1.msra.mxu0 %v571
    %649 = vmatprep.subr.mxu0 %v574
    %650 = vmatpush1.msra.mxu0 %v573
    %651 = vmatprep.subr.mxu0 %v576
    %652 = vmatpush1.msra.mxu0 %v575
    %653 = vmatprep.subr.mxu0 %v578
    %654 = vmatpush1.msra.mxu0 %v577
    %655 = vmatprep.subr.mxu0 %v580
    %656 = vmatpush1.msra.mxu0 %v579
    %657 = vmatprep.subr.mxu0 %v582
    %658 = vmatpush1.msra.mxu0 %v581
    %659 = vmatprep.subr.mxu0 %v584
    %660 = vmatpush1.msra.mxu0 %v583
    %661 = vmatprep.subr.mxu0 %v586
    %662 = vmatpush1.msra.mxu0 %v585
    %663 = vmatprep.subr.mxu0 %v588
    %664 = vmatpush1.msra.mxu0 %v587
    %665 = vmatprep.subr.mxu0 %v590
    %666 = vmatpush1.msra.mxu0 %v589
    %667 = vmatprep.subr.mxu0 %v592
    %668 = vmatpush1.msra.mxu0 %v591
    %669 = vmatprep.subr.mxu0 %v594
    %670 = vmatpush1.msra.mxu0 %v593
    %671 = vmatprep.subr.mxu0 %v596
    %672 = vmatpush1.msra.mxu0 %v595
    %673 = vmatprep.subr.mxu0 %v598
    %674 = vmatpush1.msra.mxu0 %v597
    %675 = vmatprep.subr.mxu0 %v600
    %676 = vmatpush1.msra.mxu0 %v599
    %677 = vmatprep.subr.mxu0 %v602
    %678 = vmatpush1.msra.mxu0 %v601
    %679 = vmatprep.subr.mxu0 %v604
    %680 = vmatpush1.msra.mxu0 %v603
    %681 = vmatprep.subr.mxu0 %v606
    %682 = vmatpush1.msra.mxu0 %v605
    %683 = vmatprep.subr.mxu0 %v608
    %684 = vmatpush1.msra.mxu0 %v607
    %685 = vmatprep.subr.mxu0 %v610
    %686 = vmatpush1.msra.mxu0 %v609
    %687 = vmatprep.subr.mxu0 %v612
    %688 = vmatpush1.msra.mxu0 %v611
    %689 = vmatprep.subr.mxu0 %v614
    %690 = vmatpush1.msra.mxu0 %v613
    %691 = vmatprep.subr.mxu0 %v616
    %692 = vmatpush1.msra.mxu0 %v615
    %693 = vmatprep.subr.mxu0 %v618
    %694 = vmatpush1.msra.mxu0 %v617
    %695 = vmatprep.mubr.f32.mxu0 %v554
    %696 = vmatmul.mubr.f32.gmra.mrb[0].mxu0 %v553
    %v697 = vpop.f32.mrb[0].mxu0
    %v698 = vadd.f32 %v624, %v697
    %v699 = vpop.f32.mrb[0].mxu0
    %v700 = vadd.f32 %v628, %v699
    %701 = vdwg.mxu0
    %v702 = vmul.f32 %v698, 0.2
    %v703 = vmul.f32 %v700, 0.2
    %v704 = vmax.f32 %v698, %v702
    %v705 = vmax.f32 %v700, %v703
    %v706 = vld [vmem:[%s5] sm:$0xff]
    %v707 = vld [vmem:[%s5 + $0x8] sm:$0xff]
    %v708 = vld [vmem:[%s5 + $0x10] sm:$0xff]
    %v709 = vld [vmem:[%s5 + $0x18] sm:$0xff]
    %v710 = vld [vmem:[%s5 + $0x20] sm:$0xff]
    %v711 = vld [vmem:[%s5 + $0x28] sm:$0xff]
    %v712 = vld [vmem:[%s5 + $0x30] sm:$0xff]
    %v713 = vld [vmem:[%s5 + $0x38] sm:$0xff]
    %v714 = vld [vmem:[%s5 + $0x40] sm:$0xff]
    %v715 = vld [vmem:[%s5 + $0x48] sm:$0xff]
    %v716 = vld [vmem:[%s5 + $0x50] sm:$0xff]
    %v717 = vld [vmem:[%s5 + $0x58] sm:$0xff]
    %v718 = vld [vmem:[%s5 + $0x60] sm:$0xff]
    %v719 = vld [vmem:[%s5 + $0x68] sm:$0xff]
    %v720 = vld [vmem:[%s5 + $0x70] sm:$0xff]
    %v721 = vld [vmem:[%s5 + $0x78] sm:$0xff]
    %v722 = vld [vmem:[%s5 + $0x80] sm:$0xff]
    %v723 = vld [vmem:[%s5 + $0x88] sm:$0xff]
    %v724 = vld [vmem:[%s5 + $0x90] sm:$0xff]
    %v725 = vld [vmem:[%s5 + $0x98] sm:$0xff]
    %v726 = vld [vmem:[%s5 + $0xa0] sm:$0xff]
    %v727 = vld [vmem:[%s5 + $0xa8] sm:$0xff]
    %v728 = vld [vmem:[%s5 + $0xb0] sm:$0xff]
    %v729 = vld [vmem:[%s5 + $0xb8] sm:$0xff]
    %v730 = vld [vmem:[%s5 + $0xc0] sm:$0xff]
    %v731 = vld [vmem:[%s5 + $0xc8] sm:$0xff]
    %v732 = vld [vmem:[%s5 + $0xd0] sm:$0xff]
    %v733 = vld [vmem:[%s5 + $0xd8] sm:$0xff]
    %v734 = vld [vmem:[%s5 + $0xe0] sm:$0xff]
    %v735 = vld [vmem:[%s5 + $0xe8] sm:$0xff]
    %v736 = vld [vmem:[%s5 + $0xf0] sm:$0xff]
    %v737 = vld [vmem:[%s5 + $0xf8] sm:$0xff]
    %v738 = vld [vmem:[#allocation2] sm:$0x1]
    %v740 = vlaneseq
    %v741 = vshrl.u32 %v740, 7
    %v742 = vsub.s32 0, %v741
    %v743 = vrot.slane %v738, %v742
    %745 = vmatprep.subr.mxu0 0.0
    %746 = vmatpush1.msra.mxu0 %v706
    %747 = vmatprep.subr.mxu0 0.0
    %748 = vmatpush1.msra.mxu0 %v707
    %749 = vmatprep.subr.mxu0 0.0
    %750 = vmatpush1.msra.mxu0 %v708
    %751 = vmatprep.subr.mxu0 0.0
    %752 = vmatpush1.msra.mxu0 %v709
    %753 = vmatprep.subr.mxu0 0.0
    %754 = vmatpush1.msra.mxu0 %v710
    %755 = vmatprep.subr.mxu0 0.0
    %756 = vmatpush1.msra.mxu0 %v711
    %757 = vmatprep.subr.mxu0 0.0
    %758 = vmatpush1.msra.mxu0 %v712
    %759 = vmatprep.subr.mxu0 0.0
    %760 = vmatpush1.msra.mxu0 %v713
    %761 = vmatprep.subr.mxu0 0.0
    %762 = vmatpush1.msra.mxu0 %v714
    %763 = vmatprep.subr.mxu0 0.0
    %764 = vmatpush1.msra.mxu0 %v715
    %765 = vmatprep.subr.mxu0 0.0
    %766 = vmatpush1.msra.mxu0 %v716
    %767 = vmatprep.subr.mxu0 0.0
    %768 = vmatpush1.msra.mxu0 %v717
    %769 = vmatprep.subr.mxu0 0.0
    %770 = vmatpush1.msra.mxu0 %v718
    %771 = vmatprep.subr.mxu0 0.0
    %772 = vmatpush1.msra.mxu0 %v719
    %773 = vmatprep.subr.mxu0 0.0
    %774 = vmatpush1.msra.mxu0 %v720
    %775 = vmatprep.subr.mxu0 0.0
    %776 = vmatpush1.msra.mxu0 %v721
    %777 = vmatprep.subr.mxu0 0.0
    %778 = vmatpush1.msra.mxu0 %v722
    %779 = vmatprep.subr.mxu0 0.0
    %780 = vmatpush1.msra.mxu0 %v723
    %781 = vmatprep.subr.mxu0 0.0
    %782 = vmatpush1.msra.mxu0 %v724
    %783 = vmatprep.subr.mxu0 0.0
    %784 = vmatpush1.msra.mxu0 %v725
    %785 = vmatprep.subr.mxu0 0.0
    %786 = vmatpush1.msra.mxu0 %v726
    %787 = vmatprep.subr.mxu0 0.0
    %788 = vmatpush1.msra.mxu0 %v727
    %789 = vmatprep.subr.mxu0 0.0
    %790 = vmatpush1.msra.mxu0 %v728
    %791 = vmatprep.subr.mxu0 0.0
    %792 = vmatpush1.msra.mxu0 %v729
    %793 = vmatprep.subr.mxu0 0.0
    %794 = vmatpush1.msra.mxu0 %v730
    %795 = vmatprep.subr.mxu0 0.0
    %796 = vmatpush1.msra.mxu0 %v731
    %797 = vmatprep.subr.mxu0 0.0
    %798 = vmatpush1.msra.mxu0 %v732
    %799 = vmatprep.subr.mxu0 0.0
    %800 = vmatpush1.msra.mxu0 %v733
    %801 = vmatprep.subr.mxu0 0.0
    %802 = vmatpush1.msra.mxu0 %v734
    %803 = vmatprep.subr.mxu0 0.0
    %804 = vmatpush1.msra.mxu0 %v735
    %805 = vmatprep.subr.mxu0 0.0
    %806 = vmatpush1.msra.mxu0 %v736
    %807 = vmatprep.subr.mxu0 0.0
    %808 = vmatpush1.msra.mxu0 %v737
    %809 = vmatprep.mubr.f32.mxu0 %v705
    %810 = vmatmul.mubr.f32.gmra.mrb[0].mxu0 %v704
    %v811 = vpop.f32.mrb[0].mxu0
    %v812 = vadd.f32 %v743, %v811
    %v813 = vpop.f32.mrb[0].mxu0
    %814 = vdwg.mxu0
    %v815 = vxor.u32 %v812, 2147483648
    %v816 = vmul.f32 %v815, 1.442695
    %v817 = vpow.pop %v816
    %v818 = vadd.f32 %v817, 1.0
    %v819 = vrcp.pop %v818
    %v820 = vmul.f32 1.0, %v819
    %vm821 = vcmask 3072
    %822 = vst.msk [vmem:[%s7] sm:$0xf] %vm821, %v820
    // Predicated region
    $region34: #{vanilla_d_forward.1} parent=1 // pred_check
      _
    $region35: #{vanilla_d_forward.1} parent=1 // pred_check_branch
      %824 = sbr.rel (0) target = $region37
    $region36: #{vanilla_d_forward.1} parent=1 // pred_region
      _
    $region37: #{vanilla_d_forward.1} parent=1 // pred_fallthru
      _
    // Predicated region
    $region38: #{vanilla_d_forward.1} parent=1 // pred_check
      _
    $region39: #{vanilla_d_forward.1} parent=1 // pred_check_branch
      %826 = sbr.rel (0) target = $region41
    $region40: #{vanilla_d_forward.1} parent=1 // pred_region
      _
    $region41: #{vanilla_d_forward.1} parent=1 // pred_fallthru
      _
    %827 = vsyncpa [#allocation4], 1

</llo_original>
